<compile_context>
chip_gen: v7x
topology: tpu7x:2x2x1
jax: 0.10.0
libtpu: 0.0.40
codegen_flags: <defaults>
</compile_context>

<pallas_src>
import functools

import jax
import jax.numpy as jnp
from jax import lax
from jax.experimental import pallas as pl
from jax.experimental.pallas import tpu as pltpu


def _fused_gather_ln_kernel(ids_ref, table_ref, gamma_ref, beta_ref, out_ref,
                            gathered_ref, *, eps):
    """Fused row gather + LayerNorm.

    ids_ref:      (N,)   int32   SMEM   row indices into the stacked table
    table_ref:    (V, E) float32 VMEM   stacked [dx | proc | visit] table
    gamma_ref:    (1, E) float32 VMEM   LayerNorm scale
    beta_ref:     (1, E) float32 VMEM   LayerNorm shift
    out_ref:      (N, E) float32 VMEM   normalized embeddings
    gathered_ref: (N, E) float32 VMEM scratch
    """
    n = out_ref.shape[0]

    # True gather: ids are cheap scalar reads from SMEM; each step is one
    # (1, E) VMEM load at a dynamic sublane offset.  No MXU, no one-hot.
    # NOTE: ids are assumed in-range (same precondition as nn.Embedding);
    # an out-of-range id would read an arbitrary table row.
    @pl.loop(0, n)
    def _(i):
        idx = ids_ref[i]
        gathered_ref[pl.ds(i, 1), :] = table_ref[pl.ds(idx, 1), :]

    # LayerNorm over E for all N rows at once; rsqrt lands on the EUP slot.
    x = gathered_ref[...]
    mean = jnp.mean(x, axis=-1, keepdims=True)
    centered = x - mean
    var = jnp.mean(centered * centered, axis=-1, keepdims=True)
    inv = lax.rsqrt(var + eps)
    out_ref[...] = (centered * inv) * gamma_ref[...] + beta_ref[...]
    # TODO(synk): dropout is identity here (eval mode); training-mode dropout
    # would use pltpu.prng_seed + pltpu.stateful_bernoulli on the normalized rows.


def _fused_embed_layernorm(ids, table, gamma, beta, *, eps):
    """Single-launch gather + LayerNorm over all ids."""
    n = int(ids.shape[0])
    v, e = table.shape
    cost = pl.CostEstimate(
        flops=8 * n * e,                                   # LayerNorm arithmetic
        transcendentals=n,                                 # one rsqrt per row
        bytes_accessed=4 * (n + v * e + 2 * e + 2 * n * e),
    )
    kern = functools.partial(_fused_gather_ln_kernel, eps=eps)
    return pl.pallas_call(
        kern,
        out_shape=jax.ShapeDtypeStruct((n, e), jnp.float32),
        in_specs=[
            pl.BlockSpec(memory_space=pltpu.MemorySpace.SMEM),   # ids
            pl.BlockSpec(memory_space=pltpu.MemorySpace.VMEM),   # table
            pl.BlockSpec(memory_space=pltpu.MemorySpace.VMEM),   # gamma
            pl.BlockSpec(memory_space=pltpu.MemorySpace.VMEM),   # beta
        ],
        out_specs=pl.BlockSpec(memory_space=pltpu.MemorySpace.VMEM),
        scratch_shapes=[pltpu.VMEM((n, e), jnp.float32)],
        cost_estimate=cost,
    )(ids.astype(jnp.int32), table, gamma, beta)


class FeatureEmbedderPallas:
    """JAX/Pallas equivalent of gct-pyhealth's FeatureEmbedder forward pass."""

    def __init__(self, feature_keys, vocab_sizes, embedding_dim, hidden_dropout, key):
        self.feature_keys = feature_keys
        self.embedding_dim = embedding_dim
        self.hidden_dropout = hidden_dropout   # eval mode: identity
        self.eps = 1e-5
        E = embedding_dim
        ks = jax.random.split(key, 5)

        self.v_dx = vocab_sizes['conditions_hash'] + 1
        self.v_px = vocab_sizes['procedures_hash'] + 1
        dx = jax.random.normal(ks[0], (self.v_dx, E), jnp.float32)
        dx = dx.at[vocab_sizes['conditions_hash']].set(0.0)   # padding_idx row -> 0
        px = jax.random.normal(ks[1], (self.v_px, E), jnp.float32)
        px = px.at[vocab_sizes['procedures_hash']].set(0.0)   # padding_idx row -> 0
        self.dx_table = dx
        self.proc_table = px
        self.visit_table = jax.random.normal(ks[2], (1, E), jnp.float32)

        # Stacked table so the whole forward is ONE pallas_call:
        #   rows [0, v_dx)            -> conditions
        #   rows [v_dx, v_dx+v_px)    -> procedures (ids offset by v_dx)
        #   row  v_dx+v_px            -> visit
        self.combined_table = jnp.concatenate(
            [self.dx_table, self.proc_table, self.visit_table], axis=0)

        # LayerNorm params (PyTorch default is ones/zeros; randomized here so
        # the gamma/beta plumbing is exercised by the correctness check).
        self.gamma = 1.0 + 0.1 * jax.random.normal(ks[3], (1, E), jnp.float32)
        self.beta = 0.1 * jax.random.normal(ks[4], (1, E), jnp.float32)

    def __call__(self, features):
        cond = features['conditions_hash']
        proc = features['procedures_hash']
        B = features[self.feature_keys[0]].shape[0]
        E = self.embedding_dim
        n_c = int(cond.size)
        n_p = int(proc.size)

        ids = jnp.concatenate([
            cond.reshape(-1).astype(jnp.int32),
            proc.reshape(-1).astype(jnp.int32) + jnp.int32(self.v_dx),
            jnp.full((1,), self.v_dx + self.v_px, jnp.int32),
        ])

        out = _fused_embed_layernorm(ids, self.combined_table, self.gamma,
                                     self.beta, eps=self.eps)

        embeddings = {
            'conditions_hash': out[:n_c].reshape(cond.shape + (E,)),
            'procedures_hash': out[n_c:n_c + n_p].reshape(proc.shape + (E,)),
            # visit = LN of the single visit row, broadcast to (B, 1, E)
            # (LayerNorm is row-wise, so normalize-then-broadcast is exact).
            'visit': jnp.broadcast_to(out[n_c + n_p:][None, :, :], (B, 1, E)),
        }
        masks = {'visit': jnp.ones((B, 1), jnp.float32)}
        return embeddings, masks


def _reference(mod, features):
    """Pure-JAX reference mirroring the PyTorch forward (eval mode)."""
    def ln(x):
        mean = x.mean(-1, keepdims=True)
        var = ((x - mean) ** 2).mean(-1, keepdims=True)
        return (x - mean) / jnp.sqrt(var + mod.eps) * mod.gamma[0] + mod.beta[0]

    cond = features['conditions_hash']
    proc = features['procedures_hash']
    B = cond.shape[0]
    E = mod.embedding_dim
    embs = {
        'conditions_hash': ln(mod.dx_table[cond]),
        'procedures_hash': ln(mod.proc_table[proc]),
    }
    visit = ln(mod.visit_table[jnp.array([0])])            # (1, E)
    embs['visit'] = jnp.broadcast_to(visit[None, :, :], (B, 1, E))
    masks = {'visit': jnp.ones((B, 1), jnp.float32)}
    return embs, masks


if __name__ == "__main__":
    key = jax.random.PRNGKey(0)
    k_param, k_cond, k_proc = jax.random.split(key, 3)

    feature_keys = ['conditions_hash', 'procedures_hash']
    vocab_sizes = {'conditions_hash': 120, 'procedures_hash': 88}
    B, Lc, Lp, E = 2, 8, 8, 32

    mod = FeatureEmbedderPallas(feature_keys, vocab_sizes, embedding_dim=E,
                                hidden_dropout=0.1, key=k_param)

    cond_ids = jax.random.randint(k_cond, (B, Lc), 0, vocab_sizes['conditions_hash'] + 1)
    proc_ids = jax.random.randint(k_proc, (B, Lp), 0, vocab_sizes['procedures_hash'] + 1)
    # force some explicit padding tokens (== padding_idx) to exercise that path
    cond_ids = cond_ids.at[:, -1].set(vocab_sizes['conditions_hash'])
    proc_ids = proc_ids.at[:, -1].set(vocab_sizes['procedures_hash'])
    features = {'conditions_hash': cond_ids, 'procedures_hash': proc_ids}

    embs, masks = mod(features)
    jax.block_until_ready((embs, masks))

    embs_ref, masks_ref = _reference(mod, features)
    for name in ('conditions_hash', 'procedures_hash', 'visit'):
        assert embs[name].shape == embs_ref[name].shape, name
        assert jnp.allclose(embs[name], embs_ref[name], atol=1e-5, rtol=1e-5), name
    assert jnp.allclose(masks['visit'], masks_ref['visit'])

    print("KERNEL_OK")
</pallas_src>

<mosaic_0001>
module attributes {stable_mosaic.version = 11 : i64} {
  func.func @_fused_gather_ln_kernel(%arg0: memref<33xi32, #tpu.memory_space<smem>>, %arg1: memref<211x32xf32, #tpu.memory_space<vmem>>, %arg2: memref<1x32xf32, #tpu.memory_space<vmem>>, %arg3: memref<1x32xf32, #tpu.memory_space<vmem>>, %arg4: memref<33x32xf32, #tpu.memory_space<vmem>>, %arg5: memref<33x32xf32, #tpu.memory_space<vmem>>) attributes {dimension_semantics = [], scalar_prefetch = 0 : i64, scratch_operands = 1 : i64, tpu.core_type = #tpu.core_type<tc>} {
    %c0_i32 = arith.constant 0 : i32
    %c33_i32 = arith.constant 33 : i32
    %0 = arith.addi %c0_i32, %c33_i32 : i32
    %c1_i32 = arith.constant 1 : i32
    scf.for %arg6 = %c0_i32 to %0 step %c1_i32  : i32 {
      %c1_i32_12 = arith.constant 1 : i32
      %25 = arith.muli %arg6, %c1_i32_12 : i32
      %c0_i32_13 = arith.constant 0 : i32
      %26 = arith.addi %c0_i32_13, %25 : i32
      %27 = arith.index_cast %26 : i32 to index
      %28 = memref.load %arg0[%27] : memref<33xi32, #tpu.memory_space<smem>>
      %29 = arith.index_cast %28 : i32 to index
      %c0_14 = arith.constant 0 : index
      %30 = vector.load %arg1[%29, %c0_14] : memref<211x32xf32, #tpu.memory_space<vmem>>, vector<1x32xf32>
      %31 = arith.index_cast %26 : i32 to index
      %c0_15 = arith.constant 0 : index
      %32 = vector.load %arg5[%31, %c0_15] : memref<33x32xf32, #tpu.memory_space<vmem>>, vector<1x32xf32>
      tpu.vector_store %arg5[%31, %c0_15], %30 {strides = array<i32>} : memref<33x32xf32, #tpu.memory_space<vmem>>, vector<1x32xf32>,
    }
    %c33_i32_0 = arith.constant 33 : i32
    %c0 = arith.constant 0 : index
    %c0_1 = arith.constant 0 : index
    %1 = vector.load %arg5[%c0, %c0_1] : memref<33x32xf32, #tpu.memory_space<vmem>>, vector<33x32xf32>
    %cst = arith.constant dense<0.000000e+00> : vector<33xf32>
    %2 = vector.multi_reduction <add>, %1, %cst [1] : vector<33x32xf32> to vector<33xf32>
    %3 = vector.shape_cast %2 : vector<33xf32> to vector<33x1xf32>
    %cst_2 = arith.constant 3.200000e+01 : f32
    %4 = vector.broadcast %cst_2 : f32 to vector<33x1xf32>
    %5 = arith.divf %3, %4 : vector<33x1xf32>
    %6 = vector.broadcast %5 : vector<33x1xf32> to vector<33x32xf32>
    %7 = arith.subf %1, %6 : vector<33x32xf32>
    %8 = arith.mulf %7, %7 : vector<33x32xf32>
    %cst_3 = arith.constant dense<0.000000e+00> : vector<33xf32>
    %9 = vector.multi_reduction <add>, %8, %cst_3 [1] : vector<33x32xf32> to vector<33xf32>
    %10 = vector.shape_cast %9 : vector<33xf32> to vector<33x1xf32>
    %cst_4 = arith.constant 3.200000e+01 : f32
    %11 = vector.broadcast %cst_4 : f32 to vector<33x1xf32>
    %12 = arith.divf %10, %11 : vector<33x1xf32>
    %cst_5 = arith.constant 9.99999974E-6 : f32
    %13 = vector.broadcast %cst_5 : f32 to vector<33x1xf32>
    %14 = arith.addf %12, %13 : vector<33x1xf32>
    %15 = math.rsqrt %14 : vector<33x1xf32>
    %16 = vector.broadcast %15 : vector<33x1xf32> to vector<33x32xf32>
    %17 = arith.mulf %7, %16 : vector<33x32xf32>
    %c0_6 = arith.constant 0 : index
    %c0_7 = arith.constant 0 : index
    %18 = vector.load %arg2[%c0_6, %c0_7] : memref<1x32xf32, #tpu.memory_space<vmem>>, vector<1x32xf32>
    %19 = vector.broadcast %18 : vector<1x32xf32> to vector<33x32xf32>
    %20 = arith.mulf %17, %19 : vector<33x32xf32>
    %c0_8 = arith.constant 0 : index
    %c0_9 = arith.constant 0 : index
    %21 = vector.load %arg3[%c0_8, %c0_9] : memref<1x32xf32, #tpu.memory_space<vmem>>, vector<1x32xf32>
    %22 = vector.broadcast %21 : vector<1x32xf32> to vector<33x32xf32>
    %23 = arith.addf %20, %22 : vector<33x32xf32>
    %c0_10 = arith.constant 0 : index
    %c0_11 = arith.constant 0 : index
    %24 = vector.load %arg4[%c0_10, %c0_11] : memref<33x32xf32, #tpu.memory_space<vmem>>, vector<33x32xf32>
    tpu.vector_store %arg4[%c0_10, %c0_11], %23 {strides = array<i32>} : memref<33x32xf32, #tpu.memory_space<vmem>>, vector<33x32xf32>,
    return
  }
}

</mosaic_0001>

<llo_original>
// kernel: tpu_custom_call.1
$region0: #{tpu_custom_call.1}
  #allocation0 [shape = 'u32[]', space=smem, size = 0x4, offset = 0x4, fixed_abs, tag = 'smem constant byte address 0x4 - core index']
  #allocation1 [shape = 'u32[144,128]{1,0:T(1,128)}', space=vmem, size = 0x12000, scoped, tag = 'internal scratch']
  #allocation2 [shape = 'f32[33,32]{1,0:T(8,128)}', space=vmem, size = 0x5000, scoped, tag = 'scratch operand']
  %s0 = inlined_call_operand.vmem [shape: s32[33], index: 0, kind: input, shape index: {}]
  %s1 = inlined_call_operand.vmem [shape: f32[211,32], index: 1, kind: input, shape index: {}]
  %s2 = inlined_call_operand.vmem [shape: f32[1,32], index: 2, kind: input, shape index: {}]
  %s3 = inlined_call_operand.vmem [shape: f32[1,32], index: 3, kind: input, shape index: {}]
  %s4 = inlined_call_operand.vmem [shape: f32[33,32], index: 4, kind: output, shape index: {}]
  %s5 = sld [smem:[#allocation0]]
  $region37: #{tpu_custom_call.1} parent=0
    _
  %s7 = ssub.s32 1, %s5
  %s8 = scalar_select 0, %s7, %s5
  $region1: #{tpu_custom_call.1} parent=0
    #allocation3 [shape = 'u8[512]{0}', space=smem, size = 0x200, scoped, tag = 'input window, operand 0, single buffered']
    #allocation4 [shape = 's32[1]{0}', space=sflag, size = 0x4, scoped, tag = 'scoped memory for tpu_custom_call.1']
    %9 = vsyncpa [#allocation4], 0
    // Predicated region
    $region2: #{tpu_custom_call.1} parent=1 // pred_check
      _
    $region3: #{tpu_custom_call.1} parent=1 // pred_check_branch
      %11 = sbr.rel (0) target = $region5
    $region4: #{tpu_custom_call.1} parent=1 // pred_region
      %s13 = ssub.s32 16, 16
      %14 = vsyncadd [#allocation4], %s13
      %s16 = sshll.u32 %s0, 4
      %s17 = int_to_ptr.vmem [resolvable:$true] %s16
      %19 = dma.vmem_to_smem %s17, 16, [#allocation3], [#allocation4]
    $region5: #{tpu_custom_call.1} parent=1 // pred_fallthru
      _
    // Predicated region
    $region6: #{tpu_custom_call.1} parent=1 // pred_check
      _
    $region7: #{tpu_custom_call.1} parent=1 // pred_check_branch
      %21 = sbr.rel (0) target = $region9
    $region8: #{tpu_custom_call.1} parent=1 // pred_region
      _
    $region9: #{tpu_custom_call.1} parent=1 // pred_fallthru
      _
    // Predicated region
    $region10: #{tpu_custom_call.1} parent=1 // pred_check
      _
    $region11: #{tpu_custom_call.1} parent=1 // pred_check_branch
      %23 = sbr.rel (0) target = $region13
    $region12: #{tpu_custom_call.1} parent=1 // pred_region
      _
    $region13: #{tpu_custom_call.1} parent=1 // pred_fallthru
      _
    // Predicated region
    $region14: #{tpu_custom_call.1} parent=1 // pred_check
      _
    $region15: #{tpu_custom_call.1} parent=1 // pred_check_branch
      %25 = sbr.rel (0) target = $region17
    $region16: #{tpu_custom_call.1} parent=1 // pred_region
      _
    $region17: #{tpu_custom_call.1} parent=1 // pred_fallthru
      _
    // Predicated region
    $region18: #{tpu_custom_call.1} parent=1 // pred_check
      _
    $region19: #{tpu_custom_call.1} parent=1 // pred_check_branch
      %27 = sbr.rel (0) target = $region21
    $region20: #{tpu_custom_call.1} parent=1 // pred_region
      %28 = dma.done [#allocation4], 16
    $region21: #{tpu_custom_call.1} parent=1 // pred_fallthru
      _
    %29 = sfence
    loop: start=0, step=1, limit=33
    $region22: #{tpu_custom_call.1} parent=1 // loop_pre_header
      _
    $region23: #{tpu_custom_call.1} parent=1 // loop_header
      %s31 = sphi 0, %s35
      %p32 = scmp.ge.s32.totalorder %s31, 33
    $region24: #{tpu_custom_call.1} parent=1 // loop_header_branch
      %34 = sbr.rel (%p32) target = $region28
    $region25: #{tpu_custom_call.1} parent=1 // loop_body
      %s36 = sld [smem:[#allocation3 + %s31]]
      %s37 = scalar_lea.vmem %s1, %s36
      %v38 = vld [vmem:[%s37] sm:$0x1]
      %s39 = scalar_lea.vmem [#allocation2], %s31
      %vm40 = vcmask 253952
      %41 = vst.msk [vmem:[%s39] sm:$0x1] %vm40, %v38
    $region26: #{tpu_custom_call.1} parent=1 // loop_footer
      %s35 = sadd.s32 1, %s31
    $region27: #{tpu_custom_call.1} parent=1 // loop_footer_branch
      %30 = sbr.rel target = $region23
    $region28: #{tpu_custom_call.1} parent=1 // loop_exit
      _
    %v42 = vld [vmem:[#allocation2] sm:$0xff]
    %v43 = vld [vmem:[#allocation2 + $0x8] sm:$0xff]
    %v44 = vld [vmem:[#allocation2 + $0x10] sm:$0xff]
    %v45 = vld [vmem:[#allocation2 + $0x18] sm:$0xff]
    %v46 = vld [vmem:[#allocation2 + $0x20] sm:$0x1]
    %vm47 = vcmask 261120
    %v48 = vsel %vm47, %v42, 0.0
    %49 = vadd.xlane.f32.xlu0 %v48
    %v50 = vpop.xlane.xlu0 %49
    %v51 = vsel %vm47, %v43, 0.0
    %52 = vadd.xlane.f32.xlu0 %v51
    %v53 = vpop.xlane.xlu0 %52
    %v54 = vsel %vm47, %v44, 0.0
    %55 = vadd.xlane.f32.xlu0 %v54
    %v56 = vpop.xlane.xlu0 %55
    %v57 = vsel %vm47, %v45, 0.0
    %58 = vadd.xlane.f32.xlu0 %v57
    %v59 = vpop.xlane.xlu0 %58
    %vm60 = vcmask 253952
    %v61 = vsel %vm60, %v46, 0.0
    %62 = vadd.xlane.f32.xlu0 %v61
    %v63 = vpop.xlane.xlu0 %62
    %v64 = vrcp.pop 32.0
    %v65 = vmul.f32 %v50, %v64
    %v66 = vmul.f32 %v53, %v64
    %v67 = vmul.f32 %v56, %v64
    %v68 = vmul.f32 %v59, %v64
    %v69 = vmul.f32 %v63, %v64
    %v70 = vsub.f32 %v42, %v65
    %v71 = vsub.f32 %v43, %v66
    %v72 = vsub.f32 %v44, %v67
    %v73 = vsub.f32 %v45, %v68
    %v74 = vsub.f32 %v46, %v69
    %v75 = vmul.f32 %v70, %v70
    %v76 = vmul.f32 %v71, %v71
    %v77 = vmul.f32 %v72, %v72
    %v78 = vmul.f32 %v73, %v73
    %v79 = vmul.f32 %v74, %v74
    %v80 = vsel %vm47, %v75, 0.0
    %81 = vadd.xlane.f32.xlu0 %v80
    %v82 = vpop.xlane.xlu0 %81
    %v83 = vsel %vm47, %v76, 0.0
    %84 = vadd.xlane.f32.xlu0 %v83
    %v85 = vpop.xlane.xlu0 %84
    %v86 = vsel %vm47, %v77, 0.0
    %87 = vadd.xlane.f32.xlu0 %v86
    %v88 = vpop.xlane.xlu0 %87
    %v89 = vsel %vm47, %v78, 0.0
    %90 = vadd.xlane.f32.xlu0 %v89
    %v91 = vpop.xlane.xlu0 %90
    %v92 = vsel %vm60, %v79, 0.0
    %93 = vadd.xlane.f32.xlu0 %v92
    %v94 = vpop.xlane.xlu0 %93
    %v95 = vmul.f32 %v82, %v64
    %v96 = vmul.f32 %v85, %v64
    %v97 = vmul.f32 %v88, %v64
    %v98 = vmul.f32 %v91, %v64
    %v99 = vmul.f32 %v94, %v64
    %v100 = vadd.f32 %v95, 1e-05
    %v101 = vadd.f32 %v96, 1e-05
    %v102 = vadd.f32 %v97, 1e-05
    %v103 = vadd.f32 %v98, 1e-05
    %v104 = vadd.f32 %v99, 1e-05
    %v105 = vrsqrt.pop %v100
    %v106 = vrsqrt.pop %v101
    %v107 = vrsqrt.pop %v102
    %v108 = vrsqrt.pop %v103
    %v109 = vrsqrt.pop %v104
    %v110 = vmul.f32 %v70, %v105
    %v111 = vmul.f32 %v71, %v106
    %v112 = vmul.f32 %v72, %v107
    %v113 = vmul.f32 %v73, %v108
    %v114 = vmul.f32 %v74, %v109
    %v115 = vld [vmem:[%s2] sm:$0x1]
    %v117 = vlaneseq
    %v118 = vshrl.u32 %v117, 7
    %v119 = vsub.s32 0, %v118
    %v120 = vrot.slane %v115, %v119
    %v122 = vmul.f32 %v110, %v120
    %v123 = vmul.f32 %v111, %v120
    %v124 = vmul.f32 %v112, %v120
    %v125 = vmul.f32 %v113, %v120
    %v126 = vmul.f32 %v114, %v120
    %v127 = vld [vmem:[%s3] sm:$0x1]
    %v129 = vlaneseq
    %v130 = vshrl.u32 %v129, 7
    %v131 = vsub.s32 0, %v130
    %v132 = vrot.slane %v127, %v131
    %v134 = vadd.f32 %v122, %v132
    %v135 = vadd.f32 %v123, %v132
    %v136 = vadd.f32 %v124, %v132
    %v137 = vadd.f32 %v125, %v132
    %v138 = vadd.f32 %v126, %v132
    %139 = vst.msk [vmem:[%s4] sm:$0xff] %vm47, %v134
    %140 = vst.msk [vmem:[%s4 + $0x8] sm:$0xff] %vm47, %v135
    %141 = vst.msk [vmem:[%s4 + $0x10] sm:$0xff] %vm47, %v136
    %142 = vst.msk [vmem:[%s4 + $0x18] sm:$0xff] %vm47, %v137
    %143 = vst.msk [vmem:[%s4 + $0x20] sm:$0x1] %vm60, %v138
    // Predicated region
    $region29: #{tpu_custom_call.1} parent=1 // pred_check
      _
    $region30: #{tpu_custom_call.1} parent=1 // pred_check_branch
      %145 = sbr.rel (0) target = $region32
    $region31: #{tpu_custom_call.1} parent=1 // pred_region
      _
    $region32: #{tpu_custom_call.1} parent=1 // pred_fallthru
      _
    // Predicated region
    $region33: #{tpu_custom_call.1} parent=1 // pred_check
      _
    $region34: #{tpu_custom_call.1} parent=1 // pred_check_branch
      %147 = sbr.rel (0) target = $region36
    $region35: #{tpu_custom_call.1} parent=1 // pred_region
      _
    $region36: #{tpu_custom_call.1} parent=1 // pred_fallthru
      _
    %148 = vsyncpa [#allocation4], 1

</llo_original>
